<compile_context>
chip_gen: v5e
topology: v5e:2x2
jax: 0.10.0
libtpu: 0.0.40
codegen_flags: <defaults>
</compile_context>

<pallas_src>
import jax
import jax.numpy as jnp
from jax.experimental import pallas as pl
from jax.experimental.pallas import tpu as pltpu

B = 2
C, H, W = 4, 16, 16
IN_FEATURES = C * H * W          # 1024
HIDDEN = 128
NUM_CLASSES = 10
NP = 128                         # lane-dense padded class dimension


def _vmem():
    return pl.BlockSpec(memory_space=pltpu.MemorySpace.VMEM)


def _smem():
    return pl.BlockSpec(memory_space=pltpu.MemorySpace.SMEM)


# ----------------------------- Pallas kernels -----------------------------

def _forward_kernel(x_ref, w1t_ref, b1_ref, w2c_ref, b2_ref, o_ref):
    # Standalone fc1 -> ReLU -> fc2 (logits only).  w2c is [W2^T | |W2^T|];
    # the static, 128-aligned slice picks the plain-weight half without a
    # duplicate copy of W2^T living in params.
    npad = b2_ref.shape[1]
    h = jnp.maximum(
        jnp.dot(x_ref[...], w1t_ref[...], preferred_element_type=jnp.float32)
        + b1_ref[...], 0.0)
    o_ref[...] = (jnp.dot(h, w2c_ref[:, :npad],
                          preferred_element_type=jnp.float32) + b2_ref[...])


def _ibp_fused_kernel(x_ref, eps_ref, y_ref, w1t_ref, b1_ref, a1_ref,
                      w2c_ref, b2_ref,
                      logit_ref, lb_ref, ub_ref, wc_ref):
    # Entire IBP chain + plain forward fused:
    #   input box -> _get_bounds_affine(fc1) -> ReLU bounds
    #   -> _get_bounds_affine(fc2) -> worst-case select, plus logits.
    x = x_ref[...]                                    # (B, K)
    eps = eps_ref[0, 0]
    bsz = x.shape[0]
    npad = b2_ref.shape[1]

    # Layer 1.  Input box has mu = x, st = eps (constant), so the radius is
    # batch-independent: st1 = eps * colsum(|W1^T|) -- no |W1| matmul needed.
    mu1 = jnp.dot(x, w1t_ref[...],
                  preferred_element_type=jnp.float32) + b1_ref[...]   # (B, H)
    st1 = eps * a1_ref[...]                                           # (1, H)

    # ReLU monotone bounds (_get_bounds_monotonic with act = ReLU).  The plain
    # forward hidden activation is just relu(mu1) -- reuse it for logits.
    lo1 = jnp.maximum(mu1 - st1, 0.0)
    hi1 = jnp.maximum(mu1 + st1, 0.0)
    h = jnp.maximum(mu1, 0.0)

    # Layer 2: one MXU issue for bounds AND logits.
    #   [mu2; st2; h] @ [W2^T | |W2^T|]   (3B x H) @ (H x 2NP)
    # 2NP = 256 lanes = one MXU column tile on v6e/v7x.
    mu2 = (lo1 + hi1) * 0.5
    st2 = (hi1 - lo1) * 0.5
    ms = jnp.concatenate([mu2, st2, h], axis=0)        # (3B, H)
    r2 = jnp.dot(ms, w2c_ref[...],
                 preferred_element_type=jnp.float32)   # (3B, 2NP)
    b2 = b2_ref[...]
    mu_o = r2[:bsz, :npad] + b2
    st_o = r2[bsz:2 * bsz, npad:]
    logits = r2[2 * bsz:, :npad] + b2

    lb = mu_o - st_o
    ub = mu_o + st_o
    logit_ref[...] = logits
    lb_ref[...] = lb
    ub_ref[...] = ub

    # Worst-case logits: lower bound for the true class, upper bound otherwise.
    cls = jax.lax.broadcasted_iota(jnp.int32, (bsz, npad), 1)
    wc_ref[...] = jnp.where(cls == y_ref[...], lb, ub)


def _make_multi_axpy_kernel(n_pairs):
    # One launch updates every parameter tensor:  o_i = p_i + alpha * g_i.
    # alpha lives in SMEM so one compiled kernel serves every learning rate.
    def kernel(alpha_ref, *refs):
        a = alpha_ref[0, 0]
        for i in range(n_pairs):
            p = refs[2 * i]
            g = refs[2 * i + 1]
            o = refs[2 * n_pairs + i]
            o[...] = p[...] + a * g[...]
    return kernel


# ------------------------------- wrappers ---------------------------------

def prepare_params(w1, b1, w2, b2):
    """One-time (outside the hot path) weight massaging.

    - transpose to (in, out) so kernels do plain (B,K)x(K,N) MXU matmuls,
    - precompute a1 = colsum(|W1^T|) so the layer-1 IBP radius needs no |W1|,
    - pad layer-2 outputs to NP=128 lanes (lane-dense stores),
    - precompute [W2^T | |W2^T|] for the single stacked layer-2 matmul.
    """
    w1t = w1.T                                            # (K, H)
    a1 = jnp.sum(jnp.abs(w1t), axis=0)[None, :]           # (1, H)
    w2t = w2.T                                            # (H, NUM_CLASSES)
    pad = NP - w2t.shape[1]
    w2t_pad = jnp.pad(w2t, ((0, 0), (0, pad)))            # (H, NP)
    b2_pad = jnp.pad(b2, (0, pad))                        # (NP,)
    return dict(
        w1t=w1t,
        b1=b1[None, :],
        a1=a1,
        w2_cat=jnp.concatenate([w2t_pad, jnp.abs(w2t_pad)], axis=1),  # (H, 2NP)
        b2=b2_pad[None, :],
    )


def forward(x, params):
    xf = x.reshape(x.shape[0], -1)
    bsz, k = xf.shape
    cost = pl.CostEstimate(
        flops=2 * bsz * k * HIDDEN + 2 * bsz * HIDDEN * NP,
        transcendentals=0,
        bytes_accessed=4 * (xf.size + params["w1t"].size + params["b1"].size
                            + params["w2_cat"].size + params["b2"].size
                            + bsz * NP),
    )
    out = pl.pallas_call(
        _forward_kernel,
        out_shape=jax.ShapeDtypeStruct((bsz, NP), jnp.float32),
        in_specs=[_vmem()] * 5,
        out_specs=_vmem(),
        cost_estimate=cost,
    )(xf, params["w1t"], params["b1"], params["w2_cat"], params["b2"])
    return out[:, :NUM_CLASSES]


def ibp_all(x, y, eps, params):
    """Single fused call: returns (logits, lb, ub, worst_case_logits).

    Weights are DMA'd from HBM exactly once.  This is the entry point to use
    in a certified-training step; ibp_forward / get_worst_case_logits below
    are convenience wrappers around it.
    """
    xf = x.reshape(x.shape[0], -1)
    bsz, k = xf.shape
    eps_arr = jnp.asarray(eps, jnp.float32).reshape(1, 1)
    y_col = jnp.asarray(y, jnp.int32).reshape(bsz, 1)
    shp = jax.ShapeDtypeStruct((bsz, NP), jnp.float32)
    cost = pl.CostEstimate(
        flops=2 * bsz * k * HIDDEN + 2 * (3 * bsz) * HIDDEN * (2 * NP),
        transcendentals=0,
        bytes_accessed=4 * (xf.size + params["w1t"].size + params["a1"].size
                            + params["b1"].size + params["w2_cat"].size
                            + params["b2"].size + 4 * bsz * NP),
    )
    logits, lb, ub, wc = pl.pallas_call(
        _ibp_fused_kernel,
        out_shape=(shp, shp, shp, shp),
        in_specs=[_vmem(), _smem(), _vmem(), _vmem(), _vmem(), _vmem(),
                  _vmem(), _vmem()],
        out_specs=(_vmem(), _vmem(), _vmem(), _vmem()),
        cost_estimate=cost,
    )(xf, eps_arr, y_col, params["w1t"], params["b1"], params["a1"],
      params["w2_cat"], params["b2"])
    return (logits[:, :NUM_CLASSES], lb[:, :NUM_CLASSES],
            ub[:, :NUM_CLASSES], wc[:, :NUM_CLASSES])


def ibp_forward(x, eps, params):
    dummy_y = jnp.zeros((x.shape[0],), jnp.int32)
    _, lb, ub, _ = ibp_all(x, dummy_y, eps, params)
    return lb, ub


def get_worst_case_logits(x, y, eps, params):
    _, _, _, wc = ibp_all(x, y, eps, params)
    return wc


def _multi_axpy(params_list, others_list, alpha):
    # o_i = p_i + alpha * g_i for every tensor in ONE pallas_call.
    # No input_output_aliases: callers keep ownership of their param arrays
    # (the donated-buffer footgun from review is gone; perf impact is nil at
    # these sizes since the bytes moved are identical).
    n = len(params_list)
    alpha_arr = jnp.asarray(alpha, jnp.float32).reshape(1, 1)
    args = [alpha_arr]
    for p, g in zip(params_list, others_list):
        args.append(p)
        args.append(g)
    out_shape = tuple(jax.ShapeDtypeStruct(p.shape, p.dtype)
                      for p in params_list)
    outs = pl.pallas_call(
        _make_multi_axpy_kernel(n),
        out_shape=out_shape,
        in_specs=[_smem()] + [_vmem()] * (2 * n),
        out_specs=tuple(_vmem() for _ in range(n)),
    )(*args)
    return list(outs)


def update_params(params_list, grads_list, learning_rate):
    return _multi_axpy(params_list, grads_list, -learning_rate)


def add_noise_all(params_list, noise_list, learning_rate):
    return _multi_axpy(params_list, noise_list, learning_rate)


def update_param(param, grad, learning_rate):
    return _multi_axpy([param], [grad], -learning_rate)[0]


def add_noise(param, noise, learning_rate):
    return _multi_axpy([param], [noise], learning_rate)[0]


def get_input_size():
    return IN_FEATURES


def get_output_size():
    return NUM_CLASSES


def get_num_classes():
    return NUM_CLASSES


# ----------------------------- pure-JAX refs -------------------------------

def _forward_ref(x, w1, b1, w2, b2):
    xf = x.reshape(x.shape[0], -1)
    h = jnp.maximum(xf @ w1.T + b1, 0.0)
    return h @ w2.T + b2


def _ibp_affine_ref(wts, bias, lo, hi):
    mu, st = (lo + hi) / 2, (hi - lo) / 2
    wt = wts.T
    mu_n = mu @ wt + bias
    st_n = st @ jnp.abs(wt)
    return mu_n - st_n, mu_n + st_n


def _ibp_forward_ref(x, eps, w1, b1, w2, b2):
    xf = x.reshape(x.shape[0], -1)
    lo, hi = xf - eps, xf + eps
    lo, hi = _ibp_affine_ref(w1, b1, lo, hi)
    lo, hi = jnp.maximum(lo, 0.0), jnp.maximum(hi, 0.0)
    return _ibp_affine_ref(w2, b2, lo, hi)


# --------------------------------- main ------------------------------------

if __name__ == "__main__":
    key = jax.random.PRNGKey(0)
    kx, k1, kb1, k2, kb2, kg = jax.random.split(key, 6)

    x = jax.random.normal(kx, (B, C, H, W), dtype=jnp.float32)
    y = jnp.array([1, 7], dtype=jnp.int32)
    eps = 0.05

    # Deterministic nn.Linear-style init (uniform, 1/sqrt(fan_in) scale).
    s1 = 1.0 / jnp.sqrt(IN_FEATURES)
    w1 = jax.random.uniform(k1, (HIDDEN, IN_FEATURES), jnp.float32, -s1, s1)
    b1 = jax.random.uniform(kb1, (HIDDEN,), jnp.float32, -s1, s1)
    s2 = 1.0 / jnp.sqrt(HIDDEN)
    w2 = jax.random.uniform(k2, (NUM_CLASSES, HIDDEN), jnp.float32, -s2, s2)
    b2 = jax.random.uniform(kb2, (NUM_CLASSES,), jnp.float32, -s2, s2)

    # One-time weight prep (transpose / colsum(|W1|) / padding / |W2| cat).
    params = jax.block_until_ready(prepare_params(w1, b1, w2, b2))

    # References.
    logits_ref = _forward_ref(x, w1, b1, w2, b2)
    lb_ref, ub_ref = _ibp_forward_ref(x, eps, w1, b1, w2, b2)
    wc_ref = jnp.where(jax.nn.one_hot(y, NUM_CLASSES) > 0, lb_ref, ub_ref)

    # Single fused call: logits + IBP bounds + worst-case logits.
    logits, lb, ub, wc = jax.block_until_ready(ibp_all(x, y, eps, params))
    assert jnp.allclose(logits, logits_ref, rtol=1e-4, atol=1e-4)
    assert jnp.allclose(lb, lb_ref, rtol=1e-4, atol=1e-4)
    assert jnp.allclose(ub, ub_ref, rtol=1e-4, atol=1e-4)
    assert jnp.allclose(wc, wc_ref, rtol=1e-4, atol=1e-4)
    assert bool(jnp.all(lb <= logits + 1e-4)) and bool(jnp.all(logits <= ub + 1e-4))

    # Standalone forward (logits-only path).
    logits2 = jax.block_until_ready(forward(x, params))
    assert jnp.allclose(logits2, logits_ref, rtol=1e-4, atol=1e-4)

    # Convenience wrappers (each is still a single fused launch).
    lb2, ub2 = jax.block_until_ready(ibp_forward(x, eps, params))
    assert jnp.allclose(lb2, lb_ref, rtol=1e-4, atol=1e-4)
    assert jnp.allclose(ub2, ub_ref, rtol=1e-4, atol=1e-4)

    # Batched optimizer / noise updates: one launch for all four tensors.
    gkeys = jax.random.split(kg, 4)
    plist = [w1, b1, w2, b2]
    grads = [jax.random.normal(k, p.shape, jnp.float32)
             for k, p in zip(gkeys, plist)]
    upd = jax.block_until_ready(update_params(plist, grads, 0.01))
    for o, p, g in zip(upd, plist, grads):
        assert jnp.allclose(o, p - 0.01 * g, rtol=1e-5, atol=1e-5)
    nzd = jax.block_until_ready(add_noise_all(plist, grads, 0.01))
    for o, p, g in zip(nzd, plist, grads):
        assert jnp.allclose(o, p + 0.01 * g, rtol=1e-5, atol=1e-5)

    # Single-tensor API parity with the PyTorch module.
    upd1 = jax.block_until_ready(update_param(w1, grads[0], 0.01))
    assert jnp.allclose(upd1, w1 - 0.01 * grads[0], rtol=1e-5, atol=1e-5)
    nz1 = jax.block_until_ready(add_noise(w1, grads[0], 0.01))
    assert jnp.allclose(nz1, w1 + 0.01 * grads[0], rtol=1e-5, atol=1e-5)

    print("KERNEL_OK")
</pallas_src>

<mosaic_0001>
module attributes {stable_mosaic.version = 11 : i64} {
  func.func @_ibp_fused_kernel(%arg0: memref<2x1024xf32, #tpu.memory_space<vmem>>, %arg1: memref<1x1xf32, #tpu.memory_space<smem>>, %arg2: memref<2x1xi32, #tpu.memory_space<vmem>>, %arg3: memref<1024x128xf32, #tpu.memory_space<vmem>>, %arg4: memref<1x128xf32, #tpu.memory_space<vmem>>, %arg5: memref<1x128xf32, #tpu.memory_space<vmem>>, %arg6: memref<128x256xf32, #tpu.memory_space<vmem>>, %arg7: memref<1x128xf32, #tpu.memory_space<vmem>>, %arg8: memref<2x128xf32, #tpu.memory_space<vmem>>, %arg9: memref<2x128xf32, #tpu.memory_space<vmem>>, %arg10: memref<2x128xf32, #tpu.memory_space<vmem>>, %arg11: memref<2x128xf32, #tpu.memory_space<vmem>>) attributes {dimension_semantics = [], scalar_prefetch = 0 : i64, scratch_operands = 0 : i64, tpu.core_type = #tpu.core_type<tc>} {
    %c0 = arith.constant 0 : index
    %c0_0 = arith.constant 0 : index
    %0 = vector.load %arg0[%c0, %c0_0] : memref<2x1024xf32, #tpu.memory_space<vmem>>, vector<2x1024xf32>
    %c0_1 = arith.constant 0 : index
    %c0_2 = arith.constant 0 : index
    %1 = memref.load %arg1[%c0_1, %c0_2] : memref<1x1xf32, #tpu.memory_space<smem>>
    %c0_3 = arith.constant 0 : index
    %c0_4 = arith.constant 0 : index
    %2 = vector.load %arg3[%c0_3, %c0_4] : memref<1024x128xf32, #tpu.memory_space<vmem>>, vector<1024x128xf32>
    %cst = arith.constant dense<0.000000e+00> : vector<2x128xf32>
    %3 = tpu.matmul %0, %2, %cst {dimension_numbers = #tpu.dot_dimension_numbers<[1], [0], [0], [1], [0, 0, 1, 1], [], []>} : vector<2x1024xf32>, vector<1024x128xf32>, vector<2x128xf32> -> vector<2x128xf32>
    %c0_5 = arith.constant 0 : index
    %c0_6 = arith.constant 0 : index
    %4 = vector.load %arg4[%c0_5, %c0_6] : memref<1x128xf32, #tpu.memory_space<vmem>>, vector<1x128xf32>
    %5 = vector.broadcast %4 : vector<1x128xf32> to vector<2x128xf32>
    %6 = arith.addf %3, %5 : vector<2x128xf32>
    %c0_7 = arith.constant 0 : index
    %c0_8 = arith.constant 0 : index
    %7 = vector.load %arg5[%c0_7, %c0_8] : memref<1x128xf32, #tpu.memory_space<vmem>>, vector<1x128xf32>
    %8 = vector.broadcast %1 : f32 to vector<1x128xf32>
    %9 = arith.mulf %8, %7 : vector<1x128xf32>
    %10 = vector.broadcast %9 : vector<1x128xf32> to vector<2x128xf32>
    %11 = arith.subf %6, %10 : vector<2x128xf32>
    %cst_9 = arith.constant 0.000000e+00 : f32
    %12 = vector.broadcast %cst_9 : f32 to vector<2x128xf32>
    %13 = arith.maximumf %11, %12 : vector<2x128xf32>
    %14 = vector.broadcast %9 : vector<1x128xf32> to vector<2x128xf32>
    %15 = arith.addf %6, %14 : vector<2x128xf32>
    %cst_10 = arith.constant 0.000000e+00 : f32
    %16 = vector.broadcast %cst_10 : f32 to vector<2x128xf32>
    %17 = arith.maximumf %15, %16 : vector<2x128xf32>
    %cst_11 = arith.constant 0.000000e+00 : f32
    %18 = vector.broadcast %cst_11 : f32 to vector<2x128xf32>
    %19 = arith.maximumf %6, %18 : vector<2x128xf32>
    %20 = arith.addf %13, %17 : vector<2x128xf32>
    %cst_12 = arith.constant 5.000000e-01 : f32
    %21 = vector.broadcast %cst_12 : f32 to vector<2x128xf32>
    %22 = arith.mulf %20, %21 : vector<2x128xf32>
    %23 = arith.subf %17, %13 : vector<2x128xf32>
    %cst_13 = arith.constant 5.000000e-01 : f32
    %24 = vector.broadcast %cst_13 : f32 to vector<2x128xf32>
    %25 = arith.mulf %23, %24 : vector<2x128xf32>
    %26 = tpu.concatenate %22, %25, %19 in 0 : vector<2x128xf32>, vector<2x128xf32>, vector<2x128xf32> -> vector<6x128xf32>
    %c0_14 = arith.constant 0 : index
    %c0_15 = arith.constant 0 : index
    %27 = vector.load %arg6[%c0_14, %c0_15] : memref<128x256xf32, #tpu.memory_space<vmem>>, vector<128x256xf32>
    %cst_16 = arith.constant dense<0.000000e+00> : vector<6x256xf32>
    %28 = tpu.matmul %26, %27, %cst_16 {dimension_numbers = #tpu.dot_dimension_numbers<[1], [0], [0], [1], [0, 0, 1, 1], [], []>} : vector<6x128xf32>, vector<128x256xf32>, vector<6x256xf32> -> vector<6x256xf32>
    %c0_17 = arith.constant 0 : index
    %c0_18 = arith.constant 0 : index
    %29 = vector.load %arg7[%c0_17, %c0_18] : memref<1x128xf32, #tpu.memory_space<vmem>>, vector<1x128xf32>
    %30 = vector.extract_strided_slice %28 {offsets = [0, 0], sizes = [2, 128], strides = [1, 1]} : vector<6x256xf32> to vector<2x128xf32>
    %31 = vector.broadcast %29 : vector<1x128xf32> to vector<2x128xf32>
    %32 = arith.addf %30, %31 : vector<2x128xf32>
    %33 = vector.extract_strided_slice %28 {offsets = [2, 128], sizes = [2, 128], strides = [1, 1]} : vector<6x256xf32> to vector<2x128xf32>
    %34 = vector.extract_strided_slice %28 {offsets = [4, 0], sizes = [2, 128], strides = [1, 1]} : vector<6x256xf32> to vector<2x128xf32>
    %35 = vector.broadcast %29 : vector<1x128xf32> to vector<2x128xf32>
    %36 = arith.addf %34, %35 : vector<2x128xf32>
    %37 = arith.subf %32, %33 : vector<2x128xf32>
    %38 = arith.addf %32, %33 : vector<2x128xf32>
    %c0_19 = arith.constant 0 : index
    %c0_20 = arith.constant 0 : index
    %39 = vector.load %arg8[%c0_19, %c0_20] : memref<2x128xf32, #tpu.memory_space<vmem>>, vector<2x128xf32>
    tpu.vector_store %arg8[%c0_19, %c0_20], %36 {strides = array<i32>} : memref<2x128xf32, #tpu.memory_space<vmem>>, vector<2x128xf32>,
    %c0_21 = arith.constant 0 : index
    %c0_22 = arith.constant 0 : index
    %40 = vector.load %arg9[%c0_21, %c0_22] : memref<2x128xf32, #tpu.memory_space<vmem>>, vector<2x128xf32>
    tpu.vector_store %arg9[%c0_21, %c0_22], %37 {strides = array<i32>} : memref<2x128xf32, #tpu.memory_space<vmem>>, vector<2x128xf32>,
    %c0_23 = arith.constant 0 : index
    %c0_24 = arith.constant 0 : index
    %41 = vector.load %arg10[%c0_23, %c0_24] : memref<2x128xf32, #tpu.memory_space<vmem>>, vector<2x128xf32>
    tpu.vector_store %arg10[%c0_23, %c0_24], %38 {strides = array<i32>} : memref<2x128xf32, #tpu.memory_space<vmem>>, vector<2x128xf32>,
    %42 = tpu.iota {dimensions = array<i32: 1>} : vector<2x128xi32>
    %c0_25 = arith.constant 0 : index
    %c0_26 = arith.constant 0 : index
    %43 = vector.load %arg2[%c0_25, %c0_26] : memref<2x1xi32, #tpu.memory_space<vmem>>, vector<2x1xi32>
    %44 = vector.broadcast %43 : vector<2x1xi32> to vector<2x128xi32>
    %45 = arith.cmpi eq, %42, %44 : vector<2x128xi32>
    %46 = arith.select %45, %37, %38 : vector<2x128xi1>, vector<2x128xf32>
    %c0_27 = arith.constant 0 : index
    %c0_28 = arith.constant 0 : index
    %47 = vector.load %arg11[%c0_27, %c0_28] : memref<2x128xf32, #tpu.memory_space<vmem>>, vector<2x128xf32>
    tpu.vector_store %arg11[%c0_27, %c0_28], %46 {strides = array<i32>} : memref<2x128xf32, #tpu.memory_space<vmem>>, vector<2x128xf32>,
    return
  }
}

</mosaic_0001>

<llo_original>
// kernel: tpu_custom_call.1
$region0: #{tpu_custom_call.1}
  #allocation0 [shape = 'u32[]', space=smem, size = 0x4, offset = 0x4, fixed_abs, tag = 'smem constant byte address 0x4 - core index']
  #allocation1 [shape = 'u32[72,128]{1,0:T(1,128)}', space=vmem, size = 0x9000, scoped, tag = 'internal scratch']
  #allocation2 [shape = 'f32[1,1]{1,0:T(1,128)S(6)}', space=smem, size = 0x200, scoped, tag = 'scoped memory for tpu_custom_call.1']
  %s0 = inlined_call_operand.hbm [shape: f32[2,1024], index: 0, kind: input, shape index: {}]
  %s1 = inlined_call_operand.<no memory space> [shape: f32[1,1], index: 1, kind: input, shape index: {}]
  %s2 = inlined_call_operand.vmem [shape: s32[2,1], index: 2, kind: input, shape index: {}]
  %s3 = inlined_call_operand.hbm [shape: f32[1024,128], index: 3, kind: input, shape index: {}]
  %s4 = inlined_call_operand.vmem [shape: f32[1,128], index: 4, kind: input, shape index: {}]
  %s5 = inlined_call_operand.vmem [shape: f32[1,128], index: 5, kind: input, shape index: {}]
  %s6 = inlined_call_operand.hbm [shape: f32[128,256], index: 6, kind: input, shape index: {}]
  %s7 = inlined_call_operand.vmem [shape: f32[1,128], index: 7, kind: input, shape index: {}]
  %s8 = inlined_call_operand.hbm [shape: f32[2,128], index: 8, kind: output, shape index: {0}]
  %s9 = inlined_call_operand.hbm [shape: f32[2,128], index: 9, kind: output, shape index: {1}]
  %s10 = inlined_call_operand.hbm [shape: f32[2,128], index: 10, kind: output, shape index: {2}]
  %s11 = inlined_call_operand.hbm [shape: f32[2,128], index: 11, kind: output, shape index: {3}]
  %12 = xla_tuple %s8, %s9, %s10, %s11
  %s13 = sld [smem:[#allocation0]]
  $region78: #{tpu_custom_call.1} parent=0
    _
  %s15 = ssub.s32 1, %s13
  %s16 = scalar_select 0, %s15, %s13
  %17 = sst [smem:[#allocation2]] %s1
  $region1: #{tpu_custom_call.1} parent=0
    #allocation3 [shape = 'u8[8192]{0}', space=vmem, size = 0x2000, scoped, tag = 'input window, operand 0, single buffered']
    #allocation4 [shape = 's32[1]{0}', space=sflag, size = 0x4, scoped, tag = 'scoped memory for tpu_custom_call.1']
    #allocation5 [shape = 's32[1]{0}', space=sflag, size = 0x4, scoped, tag = 'scoped memory for tpu_custom_call.1']
    #allocation6 [shape = 'u8[524288]{0}', space=vmem, size = 0x80000, scoped, tag = 'input window, operand 3, single buffered']
    #allocation7 [shape = 's32[1]{0}', space=sflag, size = 0x4, scoped, tag = 'scoped memory for tpu_custom_call.1']
    #allocation8 [shape = 'u8[131072]{0}', space=vmem, size = 0x20000, scoped, tag = 'input window, operand 6, single buffered']
    #allocation9 [shape = 'u8[1024]{0}', space=vmem, size = 0x400, scoped, tag = 'output window, operand 0, single buffered']
    #allocation10 [shape = 'u8[1024]{0}', space=vmem, size = 0x400, scoped, tag = 'output window, operand 1, single buffered']
    #allocation11 [shape = 's32[1]{0}', space=sflag, size = 0x4, scoped, tag = 'scoped memory for tpu_custom_call.1']
    #allocation12 [shape = 'u8[1024]{0}', space=vmem, size = 0x400, scoped, tag = 'output window, operand 2, single buffered']
    #allocation13 [shape = 'u8[1024]{0}', space=vmem, size = 0x400, scoped, tag = 'output window, operand 3, single buffered']
    #allocation14 [shape = 's32[1]{0}', space=sflag, size = 0x4, scoped, tag = 'scoped memory for tpu_custom_call.1']
    %18 = vsyncpa [#allocation4], 0
    %19 = vsyncpa [#allocation7], 0
    %20 = vsyncpa [#allocation5], 0
    %21 = vsyncpa [#allocation11], 0
    %22 = vsyncpa [#allocation14], 0
    // Predicated region
    $region2: #{tpu_custom_call.1} parent=1 // pred_check
      _
    $region3: #{tpu_custom_call.1} parent=1 // pred_check_branch
      %24 = sbr.rel (0) target = $region5
    $region4: #{tpu_custom_call.1} parent=1 // pred_region
      %26 = vsyncadd [#allocation4], 0
      %s28 = sshll.u32 %s0, 4
      %s29 = int_to_ptr.hbm [resolvable:$true] %s28
      %s30 = sshll.u32 [#allocation3], 4
      %s31 = int_to_ptr.vmem [resolvable:$true] %s30
      %33 = dma.hbm_to_vmem [thread:$0]  %s29, 256, %s31, [#allocation4]
    $region5: #{tpu_custom_call.1} parent=1 // pred_fallthru
      _
    // Predicated region
    $region6: #{tpu_custom_call.1} parent=1 // pred_check
      _
    $region7: #{tpu_custom_call.1} parent=1 // pred_check_branch
      %35 = sbr.rel (0) target = $region9
    $region8: #{tpu_custom_call.1} parent=1 // pred_region
      _
    $region9: #{tpu_custom_call.1} parent=1 // pred_fallthru
      _
    // Predicated region
    $region10: #{tpu_custom_call.1} parent=1 // pred_check
      _
    $region11: #{tpu_custom_call.1} parent=1 // pred_check_branch
      %37 = sbr.rel (0) target = $region13
    $region12: #{tpu_custom_call.1} parent=1 // pred_region
      _
    $region13: #{tpu_custom_call.1} parent=1 // pred_fallthru
      _
    // Predicated region
    $region14: #{tpu_custom_call.1} parent=1 // pred_check
      _
    $region15: #{tpu_custom_call.1} parent=1 // pred_check_branch
      %39 = sbr.rel (0) target = $region17
    $region16: #{tpu_custom_call.1} parent=1 // pred_region
      %41 = vsyncadd [#allocation7], 0
      %s42 = sshll.u32 %s3, 4
      %s43 = int_to_ptr.hbm [resolvable:$true] %s42
      %s44 = sshll.u32 [#allocation6], 4
      %s45 = int_to_ptr.vmem [resolvable:$true] %s44
      %50 = dma.hbm_to_vmem [thread:$0]  %s43, 16384, %s45, [#allocation7], 128, 128, 8
    $region17: #{tpu_custom_call.1} parent=1 // pred_fallthru
      _
    // Predicated region
    $region18: #{tpu_custom_call.1} parent=1 // pred_check
      _
    $region19: #{tpu_custom_call.1} parent=1 // pred_check_branch
      %52 = sbr.rel (0) target = $region21
    $region20: #{tpu_custom_call.1} parent=1 // pred_region
      _
    $region21: #{tpu_custom_call.1} parent=1 // pred_fallthru
      _
    // Predicated region
    $region22: #{tpu_custom_call.1} parent=1 // pred_check
      _
    $region23: #{tpu_custom_call.1} parent=1 // pred_check_branch
      %54 = sbr.rel (0) target = $region25
    $region24: #{tpu_custom_call.1} parent=1 // pred_region
      _
    $region25: #{tpu_custom_call.1} parent=1 // pred_fallthru
      _
    // Predicated region
    $region26: #{tpu_custom_call.1} parent=1 // pred_check
      _
    $region27: #{tpu_custom_call.1} parent=1 // pred_check_branch
      %56 = sbr.rel (0) target = $region29
    $region28: #{tpu_custom_call.1} parent=1 // pred_region
      %58 = vsyncadd [#allocation7], 0
      %s59 = sshll.u32 %s6, 4
      %s60 = int_to_ptr.hbm [resolvable:$true] %s59
      %s61 = sshll.u32 [#allocation8], 4
      %s62 = int_to_ptr.vmem [resolvable:$true] %s61
      %67 = dma.hbm_to_vmem [thread:$0]  %s60, 4096, %s62, [#allocation7], 256, 256, 16
    $region29: #{tpu_custom_call.1} parent=1 // pred_fallthru
      _
    // Predicated region
    $region30: #{tpu_custom_call.1} parent=1 // pred_check
      _
    $region31: #{tpu_custom_call.1} parent=1 // pred_check_branch
      %69 = sbr.rel (0) target = $region33
    $region32: #{tpu_custom_call.1} parent=1 // pred_region
      _
    $region33: #{tpu_custom_call.1} parent=1 // pred_fallthru
      _
    // Predicated region
    $region34: #{tpu_custom_call.1} parent=1 // pred_check
      _
    $region35: #{tpu_custom_call.1} parent=1 // pred_check_branch
      %71 = sbr.rel (0) target = $region37
    $region36: #{tpu_custom_call.1} parent=1 // pred_region
      %73 = dma.done [#allocation4], 256
    $region37: #{tpu_custom_call.1} parent=1 // pred_fallthru
      _
    // Predicated region
    $region38: #{tpu_custom_call.1} parent=1 // pred_check
      _
    $region39: #{tpu_custom_call.1} parent=1 // pred_check_branch
      %75 = sbr.rel (0) target = $region41
    $region40: #{tpu_custom_call.1} parent=1 // pred_region
      %77 = dma.done [#allocation7], 16384
    $region41: #{tpu_custom_call.1} parent=1 // pred_fallthru
      _
    // Predicated region
    $region42: #{tpu_custom_call.1} parent=1 // pred_check
      _
    $region43: #{tpu_custom_call.1} parent=1 // pred_check_branch
      %79 = sbr.rel (0) target = $region45
    $region44: #{tpu_custom_call.1} parent=1 // pred_region
      %81 = dma.done [#allocation7], 4096
    $region45: #{tpu_custom_call.1} parent=1 // pred_fallthru
      _
    %v82 = vld [vmem:[#allocation3] sm:$0xff]
    %v83 = vld [vmem:[#allocation3 + $0x8] sm:$0xff]
    %s84 = sld [smem:[#allocation2]]
    %v85 = vld [vmem:[#allocation6] sm:$0xff]
    %v86 = vld [vmem:[#allocation6 + $0x8] sm:$0xff]
    %v87 = vld [vmem:[#allocation6 + $0x10] sm:$0xff]
    %v88 = vld [vmem:[#allocation6 + $0x18] sm:$0xff]
    %v89 = vld [vmem:[#allocation6 + $0x20] sm:$0xff]
    %v90 = vld [vmem:[#allocation6 + $0x28] sm:$0xff]
    %v91 = vld [vmem:[#allocation6 + $0x30] sm:$0xff]
    %v92 = vld [vmem:[#allocation6 + $0x38] sm:$0xff]
    %v93 = vld [vmem:[#allocation6 + $0x40] sm:$0xff]
    %v94 = vld [vmem:[#allocation6 + $0x48] sm:$0xff]
    %v95 = vld [vmem:[#allocation6 + $0x50] sm:$0xff]
    %v96 = vld [vmem:[#allocation6 + $0x58] sm:$0xff]
    %v97 = vld [vmem:[#allocation6 + $0x60] sm:$0xff]
    %v98 = vld [vmem:[#allocation6 + $0x68] sm:$0xff]
    %v99 = vld [vmem:[#allocation6 + $0x70] sm:$0xff]
    %v100 = vld [vmem:[#allocation6 + $0x78] sm:$0xff]
    %v101 = vld [vmem:[#allocation6 + $0x80] sm:$0xff]
    %v102 = vld [vmem:[#allocation6 + $0x88] sm:$0xff]
    %v103 = vld [vmem:[#allocation6 + $0x90] sm:$0xff]
    %v104 = vld [vmem:[#allocation6 + $0x98] sm:$0xff]
    %v105 = vld [vmem:[#allocation6 + $0xa0] sm:$0xff]
    %v106 = vld [vmem:[#allocation6 + $0xa8] sm:$0xff]
    %v107 = vld [vmem:[#allocation6 + $0xb0] sm:$0xff]
    %v108 = vld [vmem:[#allocation6 + $0xb8] sm:$0xff]
    %v109 = vld [vmem:[#allocation6 + $0xc0] sm:$0xff]
    %v110 = vld [vmem:[#allocation6 + $0xc8] sm:$0xff]
    %v111 = vld [vmem:[#allocation6 + $0xd0] sm:$0xff]
    %v112 = vld [vmem:[#allocation6 + $0xd8] sm:$0xff]
    %v113 = vld [vmem:[#allocation6 + $0xe0] sm:$0xff]
    %v114 = vld [vmem:[#allocation6 + $0xe8] sm:$0xff]
    %v115 = vld [vmem:[#allocation6 + $0xf0] sm:$0xff]
    %v116 = vld [vmem:[#allocation6 + $0xf8] sm:$0xff]
    %v117 = vld [vmem:[#allocation6 + $0x100] sm:$0xff]
    %v118 = vld [vmem:[#allocation6 + $0x108] sm:$0xff]
    %v119 = vld [vmem:[#allocation6 + $0x110] sm:$0xff]
    %v120 = vld [vmem:[#allocation6 + $0x118] sm:$0xff]
    %v121 = vld [vmem:[#allocation6 + $0x120] sm:$0xff]
    %v122 = vld [vmem:[#allocation6 + $0x128] sm:$0xff]
    %v123 = vld [vmem:[#allocation6 + $0x130] sm:$0xff]
    %v124 = vld [vmem:[#allocation6 + $0x138] sm:$0xff]
    %v125 = vld [vmem:[#allocation6 + $0x140] sm:$0xff]
    %v126 = vld [vmem:[#allocation6 + $0x148] sm:$0xff]
    %v127 = vld [vmem:[#allocation6 + $0x150] sm:$0xff]
    %v128 = vld [vmem:[#allocation6 + $0x158] sm:$0xff]
    %v129 = vld [vmem:[#allocation6 + $0x160] sm:$0xff]
    %v130 = vld [vmem:[#allocation6 + $0x168] sm:$0xff]
    %v131 = vld [vmem:[#allocation6 + $0x170] sm:$0xff]
    %v132 = vld [vmem:[#allocation6 + $0x178] sm:$0xff]
    %v133 = vld [vmem:[#allocation6 + $0x180] sm:$0xff]
    %v134 = vld [vmem:[#allocation6 + $0x188] sm:$0xff]
    %v135 = vld [vmem:[#allocation6 + $0x190] sm:$0xff]
    %v136 = vld [vmem:[#allocation6 + $0x198] sm:$0xff]
    %v137 = vld [vmem:[#allocation6 + $0x1a0] sm:$0xff]
    %v138 = vld [vmem:[#allocation6 + $0x1a8] sm:$0xff]
    %v139 = vld [vmem:[#allocation6 + $0x1b0] sm:$0xff]
    %v140 = vld [vmem:[#allocation6 + $0x1b8] sm:$0xff]
    %v141 = vld [vmem:[#allocation6 + $0x1c0] sm:$0xff]
    %v142 = vld [vmem:[#allocation6 + $0x1c8] sm:$0xff]
    %v143 = vld [vmem:[#allocation6 + $0x1d0] sm:$0xff]
    %v144 = vld [vmem:[#allocation6 + $0x1d8] sm:$0xff]
    %v145 = vld [vmem:[#allocation6 + $0x1e0] sm:$0xff]
    %v146 = vld [vmem:[#allocation6 + $0x1e8] sm:$0xff]
    %v147 = vld [vmem:[#allocation6 + $0x1f0] sm:$0xff]
    %v148 = vld [vmem:[#allocation6 + $0x1f8] sm:$0xff]
    %v149 = vld [vmem:[#allocation6 + $0x200] sm:$0xff]
    %v150 = vld [vmem:[#allocation6 + $0x208] sm:$0xff]
    %v151 = vld [vmem:[#allocation6 + $0x210] sm:$0xff]
    %v152 = vld [vmem:[#allocation6 + $0x218] sm:$0xff]
    %v153 = vld [vmem:[#allocation6 + $0x220] sm:$0xff]
    %v154 = vld [vmem:[#allocation6 + $0x228] sm:$0xff]
    %v155 = vld [vmem:[#allocation6 + $0x230] sm:$0xff]
    %v156 = vld [vmem:[#allocation6 + $0x238] sm:$0xff]
    %v157 = vld [vmem:[#allocation6 + $0x240] sm:$0xff]
    %v158 = vld [vmem:[#allocation6 + $0x248] sm:$0xff]
    %v159 = vld [vmem:[#allocation6 + $0x250] sm:$0xff]
    %v160 = vld [vmem:[#allocation6 + $0x258] sm:$0xff]
    %v161 = vld [vmem:[#allocation6 + $0x260] sm:$0xff]
    %v162 = vld [vmem:[#allocation6 + $0x268] sm:$0xff]
    %v163 = vld [vmem:[#allocation6 + $0x270] sm:$0xff]
    %v164 = vld [vmem:[#allocation6 + $0x278] sm:$0xff]
    %v165 = vld [vmem:[#allocation6 + $0x280] sm:$0xff]
    %v166 = vld [vmem:[#allocation6 + $0x288] sm:$0xff]
    %v167 = vld [vmem:[#allocation6 + $0x290] sm:$0xff]
    %v168 = vld [vmem:[#allocation6 + $0x298] sm:$0xff]
    %v169 = vld [vmem:[#allocation6 + $0x2a0] sm:$0xff]
    %v170 = vld [vmem:[#allocation6 + $0x2a8] sm:$0xff]
    %v171 = vld [vmem:[#allocation6 + $0x2b0] sm:$0xff]
    %v172 = vld [vmem:[#allocation6 + $0x2b8] sm:$0xff]
    %v173 = vld [vmem:[#allocation6 + $0x2c0] sm:$0xff]
    %v174 = vld [vmem:[#allocation6 + $0x2c8] sm:$0xff]
    %v175 = vld [vmem:[#allocation6 + $0x2d0] sm:$0xff]
    %v176 = vld [vmem:[#allocation6 + $0x2d8] sm:$0xff]
    %v177 = vld [vmem:[#allocation6 + $0x2e0] sm:$0xff]
    %v178 = vld [vmem:[#allocation6 + $0x2e8] sm:$0xff]
    %v179 = vld [vmem:[#allocation6 + $0x2f0] sm:$0xff]
    %v180 = vld [vmem:[#allocation6 + $0x2f8] sm:$0xff]
    %v181 = vld [vmem:[#allocation6 + $0x300] sm:$0xff]
    %v182 = vld [vmem:[#allocation6 + $0x308] sm:$0xff]
    %v183 = vld [vmem:[#allocation6 + $0x310] sm:$0xff]
    %v184 = vld [vmem:[#allocation6 + $0x318] sm:$0xff]
    %v185 = vld [vmem:[#allocation6 + $0x320] sm:$0xff]
    %v186 = vld [vmem:[#allocation6 + $0x328] sm:$0xff]
    %v187 = vld [vmem:[#allocation6 + $0x330] sm:$0xff]
    %v188 = vld [vmem:[#allocation6 + $0x338] sm:$0xff]
    %v189 = vld [vmem:[#allocation6 + $0x340] sm:$0xff]
    %v190 = vld [vmem:[#allocation6 + $0x348] sm:$0xff]
    %v191 = vld [vmem:[#allocation6 + $0x350] sm:$0xff]
    %v192 = vld [vmem:[#allocation6 + $0x358] sm:$0xff]
    %v193 = vld [vmem:[#allocation6 + $0x360] sm:$0xff]
    %v194 = vld [vmem:[#allocation6 + $0x368] sm:$0xff]
    %v195 = vld [vmem:[#allocation6 + $0x370] sm:$0xff]
    %v196 = vld [vmem:[#allocation6 + $0x378] sm:$0xff]
    %v197 = vld [vmem:[#allocation6 + $0x380] sm:$0xff]
    %v198 = vld [vmem:[#allocation6 + $0x388] sm:$0xff]
    %v199 = vld [vmem:[#allocation6 + $0x390] sm:$0xff]
    %v200 = vld [vmem:[#allocation6 + $0x398] sm:$0xff]
    %v201 = vld [vmem:[#allocation6 + $0x3a0] sm:$0xff]
    %v202 = vld [vmem:[#allocation6 + $0x3a8] sm:$0xff]
    %v203 = vld [vmem:[#allocation6 + $0x3b0] sm:$0xff]
    %v204 = vld [vmem:[#allocation6 + $0x3b8] sm:$0xff]
    %v205 = vld [vmem:[#allocation6 + $0x3c0] sm:$0xff]
    %v206 = vld [vmem:[#allocation6 + $0x3c8] sm:$0xff]
    %v207 = vld [vmem:[#allocation6 + $0x3d0] sm:$0xff]
    %v208 = vld [vmem:[#allocation6 + $0x3d8] sm:$0xff]
    %v209 = vld [vmem:[#allocation6 + $0x3e0] sm:$0xff]
    %v210 = vld [vmem:[#allocation6 + $0x3e8] sm:$0xff]
    %v211 = vld [vmem:[#allocation6 + $0x3f0] sm:$0xff]
    %v212 = vld [vmem:[#allocation6 + $0x3f8] sm:$0xff]
    %v213 = vld [vmem:[%s4] sm:$0x1]
    %v215 = vperm.slane %v213, 0
    %219 = vst [vmem:[#allocation1] ss:$4 sm:$0xff] %v82
    %s220 = scalar_lea.vmem [#allocation1], 32
    %221 = vst [vmem:[%s220] ss:$4 sm:$0xff] %v83
    %v222 = vld.sshfl [vmem:[#allocation1] sm:$0xff pattern:$0x73625140]
    %v223 = vld.sshfl [vmem:[#allocation1 + $0x8] sm:$0xff pattern:$0x73625140]
    %v224 = vld.sshfl [vmem:[#allocation1 + $0x10] sm:$0xff pattern:$0x73625140]
    %v225 = vld.sshfl [vmem:[#allocation1 + $0x18] sm:$0xff pattern:$0x73625140]
    %v226 = vld.sshfl [vmem:[#allocation1 + $0x20] sm:$0xff pattern:$0x73625140]
    %v227 = vld.sshfl [vmem:[#allocation1 + $0x28] sm:$0xff pattern:$0x73625140]
    %v228 = vld.sshfl [vmem:[#allocation1 + $0x30] sm:$0xff pattern:$0x73625140]
    %v229 = vld.sshfl [vmem:[#allocation1 + $0x38] sm:$0xff pattern:$0x73625140]
    %238 = vmatpush.msra.mxu0 %v100
    %239 = vmatpush.msra.mxu0 %v99
    %240 = vmatpush.msra.mxu0 %v98
    %241 = vmatpush.msra.mxu0 %v97
    %242 = vmatpush.msra.mxu0 %v96
    %243 = vmatpush.msra.mxu0 %v95
    %244 = vmatpush.msra.mxu0 %v94
    %245 = vmatpush.msra.mxu0 %v93
    %246 = vmatpush.msra.mxu0 %v92
    %247 = vmatpush.msra.mxu0 %v91
    %248 = vmatpush.msra.mxu0 %v90
    %249 = vmatpush.msra.mxu0 %v89
    %250 = vmatpush.msra.mxu0 %v88
    %251 = vmatpush.msra.mxu0 %v87
    %252 = vmatpush.msra.mxu0 %v86
    %253 = vmatpush.msra.mxu0 %v85
    %254 = vmatmul.f32.gmra.mxu0 %v222
    %v255 = vpop.f32.mrf.mxu0
    %v256 = vadd.f32 %v215, %v255
    %257 = vdwg.mxu0
    %258 = vmatpush.msra.mxu0 %v116
    %259 = vmatpush.msra.mxu0 %v115
    %260 = vmatpush.msra.mxu0 %v114
    %261 = vmatpush.msra.mxu0 %v113
    %262 = vmatpush.msra.mxu0 %v112
    %263 = vmatpush.msra.mxu0 %v111
    %264 = vmatpush.msra.mxu0 %v110
    %265 = vmatpush.msra.mxu0 %v109
    %266 = vmatpush.msra.mxu0 %v108
    %267 = vmatpush.msra.mxu0 %v107
    %268 = vmatpush.msra.mxu0 %v106
    %269 = vmatpush.msra.mxu0 %v105
    %270 = vmatpush.msra.mxu0 %v104
    %271 = vmatpush.msra.mxu0 %v103
    %272 = vmatpush.msra.mxu0 %v102
    %273 = vmatpush.msra.mxu0 %v101
    %274 = vmatmul.f32.gmra.mxu0 %v223
    %v275 = vpop.f32.mrf.mxu0
    %v276 = vadd.f32 %v256, %v275
    %277 = vdwg.mxu0
    %278 = vmatpush.msra.mxu0 %v132
    %279 = vmatpush.msra.mxu0 %v131
    %280 = vmatpush.msra.mxu0 %v130
    %281 = vmatpush.msra.mxu0 %v129
    %282 = vmatpush.msra.mxu0 %v128
    %283 = vmatpush.msra.mxu0 %v127
    %284 = vmatpush.msra.mxu0 %v126
    %285 = vmatpush.msra.mxu0 %v125
    %286 = vmatpush.msra.mxu0 %v124
    %287 = vmatpush.msra.mxu0 %v123
    %288 = vmatpush.msra.mxu0 %v122
    %289 = vmatpush.msra.mxu0 %v121
    %290 = vmatpush.msra.mxu0 %v120
    %291 = vmatpush.msra.mxu0 %v119
    %292 = vmatpush.msra.mxu0 %v118
    %293 = vmatpush.msra.mxu0 %v117
    %294 = vmatmul.f32.gmra.mxu0 %v224
    %v295 = vpop.f32.mrf.mxu0
    %v296 = vadd.f32 %v276, %v295
    %297 = vdwg.mxu0
    %298 = vmatpush.msra.mxu0 %v148
    %299 = vmatpush.msra.mxu0 %v147
    %300 = vmatpush.msra.mxu0 %v146
    %301 = vmatpush.msra.mxu0 %v145
    %302 = vmatpush.msra.mxu0 %v144
    %303 = vmatpush.msra.mxu0 %v143
    %304 = vmatpush.msra.mxu0 %v142
    %305 = vmatpush.msra.mxu0 %v141
    %306 = vmatpush.msra.mxu0 %v140
    %307 = vmatpush.msra.mxu0 %v139
    %308 = vmatpush.msra.mxu0 %v138
    %309 = vmatpush.msra.mxu0 %v137
    %310 = vmatpush.msra.mxu0 %v136
    %311 = vmatpush.msra.mxu0 %v135
    %312 = vmatpush.msra.mxu0 %v134
    %313 = vmatpush.msra.mxu0 %v133
    %314 = vmatmul.f32.gmra.mxu0 %v225
    %v315 = vpop.f32.mrf.mxu0
    %v316 = vadd.f32 %v296, %v315
    %317 = vdwg.mxu0
    %318 = vmatpush.msra.mxu0 %v164
    %319 = vmatpush.msra.mxu0 %v163
    %320 = vmatpush.msra.mxu0 %v162
    %321 = vmatpush.msra.mxu0 %v161
    %322 = vmatpush.msra.mxu0 %v160
    %323 = vmatpush.msra.mxu0 %v159
    %324 = vmatpush.msra.mxu0 %v158
    %325 = vmatpush.msra.mxu0 %v157
    %326 = vmatpush.msra.mxu0 %v156
    %327 = vmatpush.msra.mxu0 %v155
    %328 = vmatpush.msra.mxu0 %v154
    %329 = vmatpush.msra.mxu0 %v153
    %330 = vmatpush.msra.mxu0 %v152
    %331 = vmatpush.msra.mxu0 %v151
    %332 = vmatpush.msra.mxu0 %v150
    %333 = vmatpush.msra.mxu0 %v149
    %334 = vmatmul.f32.gmra.mxu0 %v226
    %v335 = vpop.f32.mrf.mxu0
    %v336 = vadd.f32 %v316, %v335
    %337 = vdwg.mxu0
    %338 = vmatpush.msra.mxu0 %v180
    %339 = vmatpush.msra.mxu0 %v179
    %340 = vmatpush.msra.mxu0 %v178
    %341 = vmatpush.msra.mxu0 %v177
    %342 = vmatpush.msra.mxu0 %v176
    %343 = vmatpush.msra.mxu0 %v175
    %344 = vmatpush.msra.mxu0 %v174
    %345 = vmatpush.msra.mxu0 %v173
    %346 = vmatpush.msra.mxu0 %v172
    %347 = vmatpush.msra.mxu0 %v171
    %348 = vmatpush.msra.mxu0 %v170
    %349 = vmatpush.msra.mxu0 %v169
    %350 = vmatpush.msra.mxu0 %v168
    %351 = vmatpush.msra.mxu0 %v167
    %352 = vmatpush.msra.mxu0 %v166
    %353 = vmatpush.msra.mxu0 %v165
    %354 = vmatmul.f32.gmra.mxu0 %v227
    %v355 = vpop.f32.mrf.mxu0
    %v356 = vadd.f32 %v336, %v355
    %357 = vdwg.mxu0
    %358 = vmatpush.msra.mxu0 %v196
    %359 = vmatpush.msra.mxu0 %v195
    %360 = vmatpush.msra.mxu0 %v194
    %361 = vmatpush.msra.mxu0 %v193
    %362 = vmatpush.msra.mxu0 %v192
    %363 = vmatpush.msra.mxu0 %v191
    %364 = vmatpush.msra.mxu0 %v190
    %365 = vmatpush.msra.mxu0 %v189
    %366 = vmatpush.msra.mxu0 %v188
    %367 = vmatpush.msra.mxu0 %v187
    %368 = vmatpush.msra.mxu0 %v186
    %369 = vmatpush.msra.mxu0 %v185
    %370 = vmatpush.msra.mxu0 %v184
    %371 = vmatpush.msra.mxu0 %v183
    %372 = vmatpush.msra.mxu0 %v182
    %373 = vmatpush.msra.mxu0 %v181
    %374 = vmatmul.f32.gmra.mxu0 %v228
    %v375 = vpop.f32.mrf.mxu0
    %v376 = vadd.f32 %v356, %v375
    %377 = vdwg.mxu0
    %378 = vmatpush.msra.mxu0 %v212
    %379 = vmatpush.msra.mxu0 %v211
    %380 = vmatpush.msra.mxu0 %v210
    %381 = vmatpush.msra.mxu0 %v209
    %382 = vmatpush.msra.mxu0 %v208
    %383 = vmatpush.msra.mxu0 %v207
    %384 = vmatpush.msra.mxu0 %v206
    %385 = vmatpush.msra.mxu0 %v205
    %386 = vmatpush.msra.mxu0 %v204
    %387 = vmatpush.msra.mxu0 %v203
    %388 = vmatpush.msra.mxu0 %v202
    %389 = vmatpush.msra.mxu0 %v201
    %390 = vmatpush.msra.mxu0 %v200
    %391 = vmatpush.msra.mxu0 %v199
    %392 = vmatpush.msra.mxu0 %v198
    %393 = vmatpush.msra.mxu0 %v197
    %394 = vmatmul.f32.gmra.mxu0 %v229
    %v395 = vpop.f32.mrf.mxu0
    %v396 = vadd.f32 %v376, %v395
    %397 = vdwg.mxu0
    %v398 = vld [vmem:[%s5] sm:$0x1]
    %v399 = vstv %s84
    %v400 = vmul.f32 %v399, %v398
    %v402 = vperm.slane %v400, 0
    %v404 = vsub.f32 %v396, %v402
    %v405 = vmax.f32 %v404, 0.0
    %v406 = vadd.f32 %v396, %v402
    %v407 = vmax.f32 %v406, 0.0
    %v408 = vmax.f32 %v396, 0.0
    %v409 = vadd.f32 %v405, %v407
    %v410 = vmul.f32 %v409, 0.5
    %v411 = vsub.f32 %v407, %v405
    %v412 = vmul.f32 %v411, 0.5
    %v414 = vrot.slane %v412, 6
    %v417 = vrot.slane %v408, 4
    %vm419 = vcmask 1041408
    %v420 = vsel %vm419, %v410, %v414
    %vm421 = vcmask 1043456
    %v422 = vsel %vm421, %v420, %v417
    %v423 = vld [vmem:[#allocation8] sm:$0xff]
    %v424 = vld [vmem:[#allocation8 + $0x8] sm:$0xff]
    %v425 = vld [vmem:[#allocation8 + $0x10] sm:$0xff]
    %v426 = vld [vmem:[#allocation8 + $0x18] sm:$0xff]
    %v427 = vld [vmem:[#allocation8 + $0x20] sm:$0xff]
    %v428 = vld [vmem:[#allocation8 + $0x28] sm:$0xff]
    %v429 = vld [vmem:[#allocation8 + $0x30] sm:$0xff]
    %v430 = vld [vmem:[#allocation8 + $0x38] sm:$0xff]
    %v431 = vld [vmem:[#allocation8 + $0x40] sm:$0xff]
    %v432 = vld [vmem:[#allocation8 + $0x48] sm:$0xff]
    %v433 = vld [vmem:[#allocation8 + $0x50] sm:$0xff]
    %v434 = vld [vmem:[#allocation8 + $0x58] sm:$0xff]
    %v435 = vld [vmem:[#allocation8 + $0x60] sm:$0xff]
    %v436 = vld [vmem:[#allocation8 + $0x68] sm:$0xff]
    %v437 = vld [vmem:[#allocation8 + $0x70] sm:$0xff]
    %v438 = vld [vmem:[#allocation8 + $0x78] sm:$0xff]
    %v439 = vld [vmem:[#allocation8 + $0x80] sm:$0xff]
    %v440 = vld [vmem:[#allocation8 + $0x88] sm:$0xff]
    %v441 = vld [vmem:[#allocation8 + $0x90] sm:$0xff]
    %v442 = vld [vmem:[#allocation8 + $0x98] sm:$0xff]
    %v443 = vld [vmem:[#allocation8 + $0xa0] sm:$0xff]
    %v444 = vld [vmem:[#allocation8 + $0xa8] sm:$0xff]
    %v445 = vld [vmem:[#allocation8 + $0xb0] sm:$0xff]
    %v446 = vld [vmem:[#allocation8 + $0xb8] sm:$0xff]
    %v447 = vld [vmem:[#allocation8 + $0xc0] sm:$0xff]
    %v448 = vld [vmem:[#allocation8 + $0xc8] sm:$0xff]
    %v449 = vld [vmem:[#allocation8 + $0xd0] sm:$0xff]
    %v450 = vld [vmem:[#allocation8 + $0xd8] sm:$0xff]
    %v451 = vld [vmem:[#allocation8 + $0xe0] sm:$0xff]
    %v452 = vld [vmem:[#allocation8 + $0xe8] sm:$0xff]
    %v453 = vld [vmem:[#allocation8 + $0xf0] sm:$0xff]
    %v454 = vld [vmem:[#allocation8 + $0xf8] sm:$0xff]
    %455 = vmatpush.msra.mxu0 %v453
    %456 = vmatpush.msra.mxu0 %v451
    %457 = vmatpush.msra.mxu0 %v449
    %458 = vmatpush.msra.mxu0 %v447
    %459 = vmatpush.msra.mxu0 %v445
    %460 = vmatpush.msra.mxu0 %v443
    %461 = vmatpush.msra.mxu0 %v441
    %462 = vmatpush.msra.mxu0 %v439
    %463 = vmatpush.msra.mxu0 %v437
    %464 = vmatpush.msra.mxu0 %v435
    %465 = vmatpush.msra.mxu0 %v433
    %466 = vmatpush.msra.mxu0 %v431
    %467 = vmatpush.msra.mxu0 %v429
    %468 = vmatpush.msra.mxu0 %v427
    %469 = vmatpush.msra.mxu0 %v425
    %470 = vmatpush.msra.mxu0 %v423
    %471 = vmatmul.f32.gmra.mxu0 %v422
    %v472 = vpop.f32.mrf.mxu0
    %v473 = vadd.f32 0.0, %v472
    %474 = vdwg.mxu0
    %475 = vmatpush.msra.mxu0 %v454
    %476 = vmatpush.msra.mxu0 %v452
    %477 = vmatpush.msra.mxu0 %v450
    %478 = vmatpush.msra.mxu0 %v448
    %479 = vmatpush.msra.mxu0 %v446
    %480 = vmatpush.msra.mxu0 %v444
    %481 = vmatpush.msra.mxu0 %v442
    %482 = vmatpush.msra.mxu0 %v440
    %483 = vmatpush.msra.mxu0 %v438
    %484 = vmatpush.msra.mxu0 %v436
    %485 = vmatpush.msra.mxu0 %v434
    %486 = vmatpush.msra.mxu0 %v432
    %487 = vmatpush.msra.mxu0 %v430
    %488 = vmatpush.msra.mxu0 %v428
    %489 = vmatpush.msra.mxu0 %v426
    %490 = vmatpush.msra.mxu0 %v424
    %491 = vmatmul.f32.gmra.mxu0 %v422
    %v492 = vpop.f32.mrf.mxu0
    %v493 = vadd.f32 0.0, %v492
    %494 = vdwg.mxu0
    %v495 = vld [vmem:[%s7] sm:$0x1]
    %v497 = vperm.slane %v495, 0
    %v499 = vadd.f32 %v473, %v497
    %v501 = vrot.slane %v493, 2
    %v503 = vsub.f32 %v499, %v501
    %v504 = vadd.f32 %v499, %v501
    %505 = vst [vmem:[#allocation9 - $0x4] sm:$0x30] %v499
    %506 = vst [vmem:[#allocation10] sm:$0x3] %v503
    %507 = vst [vmem:[#allocation12] sm:$0x3] %v504
    %v508 = vlaneseq
    %v509 = vand.u32 %v508, 127
    %v510 = vld [vmem:[%s2] sm:$0x3]
    %511 = vset.pattern.permute.xlu0 0
    %512 = vperm.xlu0 %511, %v510
    %v513 = vpop.permute.xlu0 %512
    %vm514 = vcmp.eq.s32.totalorder %v509, %v513
    %v515 = vsel %vm514, %v503, %v504
    %516 = vst [vmem:[#allocation13] sm:$0x3] %v515
    // Predicated region
    $region46: #{tpu_custom_call.1} parent=1 // pred_check
      _
    $region47: #{tpu_custom_call.1} parent=1 // pred_check_branch
      %518 = sbr.rel (0) target = $region49
    $region48: #{tpu_custom_call.1} parent=1 // pred_region
      %520 = vsyncadd [#allocation5], 0
      %s522 = sshll.u32 [#allocation9], 4
      %s523 = int_to_ptr.vmem [resolvable:$true] %s522
      %s524 = sshll.u32 %s8, 4
      %s525 = int_to_ptr.hbm [resolvable:$true] %s524
      %527 = dma.vmem_to_hbm [thread:$0]  %s523, 32, %s525, [#allocation5]
    $region49: #{tpu_custom_call.1} parent=1 // pred_fallthru
      _
    // Predicated region
    $region50: #{tpu_custom_call.1} parent=1 // pred_check
      _
    $region51: #{tpu_custom_call.1} parent=1 // pred_check_branch
      %529 = sbr.rel (0) target = $region53
    $region52: #{tpu_custom_call.1} parent=1 // pred_region
      %531 = vsyncadd [#allocation11], 0
      %s533 = sshll.u32 [#allocation10], 4
      %s534 = int_to_ptr.vmem [resolvable:$true] %s533
      %s535 = sshll.u32 %s9, 4
      %s536 = int_to_ptr.hbm [resolvable:$true] %s535
      %538 = dma.vmem_to_hbm [thread:$0]  %s534, 32, %s536, [#allocation11]
    $region53: #{tpu_custom_call.1} parent=1 // pred_fallthru
      _
    // Predicated region
    $region54: #{tpu_custom_call.1} parent=1 // pred_check
      _
    $region55: #{tpu_custom_call.1} parent=1 // pred_check_branch
      %540 = sbr.rel (0) target = $region57
    $region56: #{tpu_custom_call.1} parent=1 // pred_region
      %542 = vsyncadd [#allocation11], 0
      %s544 = sshll.u32 [#allocation12], 4
      %s545 = int_to_ptr.vmem [resolvable:$true] %s544
      %s546 = sshll.u32 %s10, 4
      %s547 = int_to_ptr.hbm [resolvable:$true] %s546
      %549 = dma.vmem_to_hbm [thread:$0]  %s545, 32, %s547, [#allocation11]
    $region57: #{tpu_custom_call.1} parent=1 // pred_fallthru
      _
    // Predicated region
    $region58: #{tpu_custom_call.1} parent=1 // pred_check
      _
    $region59: #{tpu_custom_call.1} parent=1 // pred_check_branch
      %551 = sbr.rel (0) target = $region61
    $region60: #{tpu_custom_call.1} parent=1 // pred_region
      %553 = vsyncadd [#allocation14], 0
      %s555 = sshll.u32 [#allocation13], 4
      %s556 = int_to_ptr.vmem [resolvable:$true] %s555
      %s557 = sshll.u32 %s11, 4
      %s558 = int_to_ptr.hbm [resolvable:$true] %s557
      %560 = dma.vmem_to_hbm [thread:$0]  %s556, 32, %s558, [#allocation14]
    $region61: #{tpu_custom_call.1} parent=1 // pred_fallthru
      _
    // Predicated region
    $region62: #{tpu_custom_call.1} parent=1 // pred_check
      _
    $region63: #{tpu_custom_call.1} parent=1 // pred_check_branch
      %562 = sbr.rel (0) target = $region65
    $region64: #{tpu_custom_call.1} parent=1 // pred_region
      %564 = dma.done [#allocation5], 32
    $region65: #{tpu_custom_call.1} parent=1 // pred_fallthru
      _
    // Predicated region
    $region66: #{tpu_custom_call.1} parent=1 // pred_check
      _
    $region67: #{tpu_custom_call.1} parent=1 // pred_check_branch
      %566 = sbr.rel (0) target = $region69
    $region68: #{tpu_custom_call.1} parent=1 // pred_region
      %568 = dma.done [#allocation11], 32
    $region69: #{tpu_custom_call.1} parent=1 // pred_fallthru
      _
    // Predicated region
    $region70: #{tpu_custom_call.1} parent=1 // pred_check
      _
    $region71: #{tpu_custom_call.1} parent=1 // pred_check_branch
      %570 = sbr.rel (0) target = $region73
    $region72: #{tpu_custom_call.1} parent=1 // pred_region
      %572 = dma.done [#allocation11], 32
    $region73: #{tpu_custom_call.1} parent=1 // pred_fallthru
      _
    // Predicated region
    $region74: #{tpu_custom_call.1} parent=1 // pred_check
      _
    $region75: #{tpu_custom_call.1} parent=1 // pred_check_branch
      %574 = sbr.rel (0) target = $region77
    $region76: #{tpu_custom_call.1} parent=1 // pred_region
      %576 = dma.done [#allocation14], 32
    $region77: #{tpu_custom_call.1} parent=1 // pred_fallthru
      _
    %577 = vsyncpa [#allocation4], 1
    %578 = vsyncpa [#allocation7], 1
    %579 = vsyncpa [#allocation5], 1
    %580 = vsyncpa [#allocation11], 1
    %581 = vsyncpa [#allocation14], 1

</llo_original>
